<compile_context>
chip_gen: v7x
topology: tpu7x:2x2x1
jax: 0.10.0
libtpu: 0.0.40
codegen_flags: <defaults>
</compile_context>

<pallas_src>
import jax
import jax.numpy as jnp
from jax import lax
from jax.experimental import pallas as pl
from jax.experimental.pallas import tpu as pltpu


def _round_up(x: int, m: int) -> int:
    return (x + m - 1) // m * m


def _make_focal_kernel(gamma: int, n_true: int, tile_n: int, sub_rows: int,
                       need_mask: bool):
    n_sub = tile_n // sub_rows

    def focal_loss_kernel(logits_ref, target_ref, out_ref):
        tile_start = pl.program_id(0) * tile_n

        def body(s, acc):
            r0 = pl.multiple_of(s * sub_rows, sub_rows)
            lg_nat = logits_ref[pl.ds(r0, sub_rows), :]     # (sub, C) native dtype
            tgt = target_ref[pl.ds(r0, sub_rows), :]        # (sub, 1) int32
            sub, c = lg_nat.shape

            # Row max and picked logit in the NATIVE dtype (both exact: max of
            # the inputs, and a one-hot sum with a single non-zero term).  On
            # v6e/v7x bf16 inputs this halves the VPU element work.  No lane
            # masking is needed: the block's last dim equals the true C.
            m_nat = jnp.max(lg_nat, axis=-1, keepdims=True)             # (sub,1)
            col = lax.broadcasted_iota(jnp.int32, (sub, c), 1)
            picked = jnp.sum(jnp.where(col == tgt, lg_nat, 0),
                             axis=-1, keepdims=True).astype(jnp.float32)

            # exp / logsumexp path in f32 (upcast of exact values).
            lg = lg_nat.astype(jnp.float32)
            m = m_nat.astype(jnp.float32)
            lse = jnp.log(jnp.sum(jnp.exp(lg - m), axis=-1,
                                  keepdims=True)) + m                   # (sub,1)
            ce = lse - picked                                           # (sub,1)

            # Focal weighting, faithful to the module's weights=None branch:
            # prob = exp(+ce) exactly as in the PyTorch code (note: can
            # overflow to inf for ce >~ 88 — inherited from the module).
            prob = jnp.exp(ce)
            base = 1.0 - prob
            if gamma <= 0:
                pw = jnp.ones_like(base)
            else:
                pw = base
                for _ in range(gamma - 1):      # gamma==2 -> one extra multiply
                    pw = pw * base
            focal = pw * ce                                             # (sub,1)

            # Mask rows of the ragged last tile (no wrapper-side padding).
            if need_mask:
                row = (tile_start + r0
                       + lax.broadcasted_iota(jnp.int32, (sub, 1), 0))
                focal = jnp.where(row < n_true, focal, 0.0)

            return acc + jnp.sum(focal)

        total = lax.fori_loop(0, n_sub, body, jnp.float32(0.0))
        # Per-tile partial sum written to a lane-dense (8,128) block.
        out_ref[...] = jnp.full((8, 128), total, dtype=jnp.float32)

    return focal_loss_kernel


def focal_loss(logits, targets, gamma: int = 2, reduction: str = "mean",
               tile_n: int | None = None, sub_rows: int | None = None):
    """Pallas equivalent of focalLoss(gamma, weights=None, reduction=...).

    Supports reduction in {'mean', 'sum'}.
    """
    # TODO(synk): weights-branch (class-weighted CE + exp(-ce) + /weights.sum())
    # and reduction='none' (per-row output) are not implemented here.
    assert reduction in ("mean", "sum"), "only 'mean'/'sum' supported"
    assert logits.dtype in (jnp.float32, jnp.bfloat16), \
        "focal_loss expects float32 or bfloat16 logits"

    N, C = logits.shape
    scale = float(10 if gamma <= 2 else 10 ** (gamma >> 1))
    itemsize = jnp.dtype(logits.dtype).itemsize
    C_pad = _round_up(C, 128)        # lane-padded width (VMEM accounting only)

    # --- compute sub-chunk: bounds the f32 temporaries (upcast / exp / one-hot)
    #     to ~4 * sub_rows * C_pad * 4 bytes, independent of the DMA tile size.
    if sub_rows is None:
        temp_budget = 4 * 1024 * 1024
        sub_rows = max(8, min(512, (temp_budget // (16 * C_pad)) // 8 * 8))
    sub_rows = min(sub_rows, _round_up(N, 8))
    assert sub_rows % 8 == 0 and sub_rows > 0

    # --- DMA tile: sized purely by a byte budget (no fixed row cap).  ~32 MiB
    #     of double-buffered input amortizes the per-grid-step overhead on all
    #     generations and (with the bounded temporaries + headroom below) stays
    #     inside v7x's 64 MiB physical VMEM.
    # TODO(synk): vocab-scale C (C_pad*4 per row in the MiB range) would need a
    # second 'arbitrary' grid axis over C with an online logsumexp.
    if tile_n is None:
        io_budget = 32 * 1024 * 1024
        row_io = 2 * (C_pad * itemsize + 512)   # logits row + lane-padded tgt col, x2 buffers
        rows_max = max(sub_rows, (io_budget // row_io) // sub_rows * sub_rows)
        tile_n = min(rows_max, _round_up(N, sub_rows))
        # v7x megacore: prefer >=2 grid steps so the "parallel" axis spans both TCs.
        if pl.cdiv(N, tile_n) == 1 and N > sub_rows:
            tile_n = _round_up(pl.cdiv(N, 2), sub_rows)
    assert tile_n % sub_rows == 0 and tile_n > 0

    num_tiles = pl.cdiv(N, tile_n)
    need_mask = (N % tile_n) != 0       # ragged last tile handled in-kernel

    # Targets as an int32 column; tiny (N*4 bytes) so no padding is needed —
    # the ragged last block's garbage rows are masked in-kernel.
    targets_col = targets.astype(jnp.int32).reshape(N, 1)

    # Explicit VMEM budget: double-buffered logits tile + lane-padded (x128)
    # target column + output blocks + bounded in-kernel temporaries + headroom.
    logits_blk = tile_n * C_pad * itemsize
    tgt_blk = tile_n * 512
    out_blk = 8 * 128 * 4
    temp_bytes = 4 * sub_rows * C_pad * 4 + 64 * 1024
    vmem_limit = int(2 * (logits_blk + tgt_blk) + 2 * out_blk
                     + temp_bytes + 4 * 1024 * 1024)

    out = pl.pallas_call(
        _make_focal_kernel(gamma, N, tile_n, sub_rows, need_mask),
        out_shape=jax.ShapeDtypeStruct((num_tiles * 8, 128), jnp.float32),
        grid_spec=pltpu.PrefetchScalarGridSpec(
            num_scalar_prefetch=0,
            grid=(num_tiles,),
            in_specs=[
                pl.BlockSpec((tile_n, C), lambda i: (i, 0)),   # logits tile
                pl.BlockSpec((tile_n, 1), lambda i: (i, 0)),   # target column
            ],
            out_specs=pl.BlockSpec((8, 128), lambda i: (i, 0)),  # partial sums
        ),
        compiler_params=pltpu.CompilerParams(
            dimension_semantics=("parallel",),     # shards across v7x's 2 TCs
            vmem_limit_bytes=vmem_limit,
        ),
    )(logits, targets_col)

    partials = out.reshape(num_tiles, 8, 128)[:, 0, 0]   # one value per tile
    total = jnp.sum(partials)
    if reduction == "sum":
        return total
    return total / N * scale   # 'mean' (true N), then * scale — as in the module


def _focal_loss_ref(logits, targets, gamma=2):
    # Pure-JAX reference mirroring the PyTorch module (weights=None, 'mean').
    logits = logits.astype(jnp.float32)
    lse = jax.scipy.special.logsumexp(logits, axis=-1)
    picked = jnp.take_along_axis(logits, targets[:, None], axis=-1)[:, 0]
    ce = lse - picked
    prob = jnp.exp(ce)
    focal = (1.0 - prob) ** gamma * ce
    scale = 10 if gamma <= 2 else 10 ** (gamma >> 1)
    return focal.mean() * scale


if __name__ == "__main__":
    key = jax.random.PRNGKey(0)
    k1, k2, k3, k4, k5, k6 = jax.random.split(key, 6)

    # Case 1: small f32 case (64 samples, 10 classes, C not lane-aligned),
    # single auto-sized tile path.
    N, C = 64, 10
    logits = jax.random.normal(k1, (N, C), dtype=jnp.float32)
    targets = jax.random.randint(k2, (N,), 0, C, dtype=jnp.int32)
    out = focal_loss(logits, targets)
    jax.block_until_ready(out)
    ref = _focal_loss_ref(logits, targets)
    assert jnp.allclose(out, ref, rtol=1e-4, atol=1e-4), (out, ref)

    # Case 2: ragged N with a forced multi-tile grid + inner sub-chunk loop —
    # exercises the row mask, the cdiv grid (no wrapper padding), and the
    # per-tile partial-sum ("parallel") path.
    N2, C2 = 50, 10
    logits2 = jax.random.normal(k3, (N2, C2), dtype=jnp.float32)
    targets2 = jax.random.randint(k4, (N2,), 0, C2, dtype=jnp.int32)
    out2 = focal_loss(logits2, targets2, tile_n=16, sub_rows=8)
    jax.block_until_ready(out2)
    ref2 = _focal_loss_ref(logits2, targets2)
    assert jnp.allclose(out2, ref2, rtol=1e-4, atol=1e-4), (out2, ref2)

    # Case 3: bf16 logits — exercises the native-dtype max/one-hot path with
    # the f32 exp/logsumexp path, plus the 'sum' reduction.
    N3, C3 = 64, 32
    logits3 = jax.random.normal(k5, (N3, C3), dtype=jnp.bfloat16)
    targets3 = jax.random.randint(k6, (N3,), 0, C3, dtype=jnp.int32)
    out3 = focal_loss(logits3, targets3, reduction="sum")
    jax.block_until_ready(out3)
    lse3 = jax.scipy.special.logsumexp(logits3.astype(jnp.float32), axis=-1)
    picked3 = jnp.take_along_axis(logits3.astype(jnp.float32),
                                  targets3[:, None], axis=-1)[:, 0]
    ce3 = lse3 - picked3
    ref3 = jnp.sum((1.0 - jnp.exp(ce3)) ** 2 * ce3)
    assert jnp.allclose(out3, ref3, rtol=2e-3, atol=2e-3), (out3, ref3)

    print("KERNEL_OK")
</pallas_src>

<mosaic_0001>
module attributes {stable_mosaic.version = 11 : i64} {
  func.func @focal_loss_kernel(%arg0: i32, %arg1: memref<64x10xf32, #tpu.memory_space<vmem>>, %arg2: memref<64x1xi32, #tpu.memory_space<vmem>>, %arg3: memref<8x128xf32, #tpu.memory_space<vmem>>) attributes {dimension_semantics = [#tpu.dimension_semantics<parallel>], iteration_bounds = array<i64: 1>, scalar_prefetch = 0 : i64, scratch_operands = 0 : i64, tpu.core_type = #tpu.core_type<tc>, window_params = [{transform_indices = @transform_0, window_bounds = array<i64: 64, 10>}, {transform_indices = @transform_1, window_bounds = array<i64: 64, 1>}, {transform_indices = @transform_2, window_bounds = array<i64: 8, 128>}]} {
    %cst = arith.constant 0.000000e+00 : f32
    %c0_i32 = arith.constant 0 : i32
    %c64_i32 = arith.constant 64 : i32
    %0 = arith.muli %c0_i32, %c64_i32 : i32
    %1 = tpu.assume_multiple %0, 64 : i32
    %2 = arith.index_cast %1 : i32 to index
    %c0 = arith.constant 0 : index
    %3 = vector.load %arg1[%2, %c0] : memref<64x10xf32, #tpu.memory_space<vmem>>, vector<64x10xf32>
    %4 = arith.index_cast %1 : i32 to index
    %c0_0 = arith.constant 0 : index
    %5 = vector.load %arg2[%4, %c0_0] : memref<64x1xi32, #tpu.memory_space<vmem>>, vector<64x1xi32>
    %cst_1 = arith.constant dense<0xFF800000> : vector<64xf32>
    %6 = vector.multi_reduction <maximumf>, %3, %cst_1 [1] : vector<64x10xf32> to vector<64xf32>
    %7 = vector.shape_cast %6 : vector<64xf32> to vector<64x1xf32>
    %8 = tpu.iota {dimensions = array<i32: 1>} : vector<64x10xi32>
    %9 = vector.broadcast %5 : vector<64x1xi32> to vector<64x10xi32>
    %10 = arith.cmpi eq, %8, %9 : vector<64x10xi32>
    %c0_i32_2 = arith.constant 0 : i32
    %11 = arith.sitofp %c0_i32_2 : i32 to f32
    %12 = vector.broadcast %11 : f32 to vector<64x10xf32>
    %13 = arith.select %10, %3, %12 : vector<64x10xi1>, vector<64x10xf32>
    %cst_3 = arith.constant dense<0.000000e+00> : vector<64xf32>
    %14 = vector.multi_reduction <add>, %13, %cst_3 [1] : vector<64x10xf32> to vector<64xf32>
    %15 = vector.shape_cast %14 : vector<64xf32> to vector<64x1xf32>
    %16 = vector.broadcast %7 : vector<64x1xf32> to vector<64x10xf32>
    %17 = arith.subf %3, %16 : vector<64x10xf32>
    %18 = math.exp %17 : vector<64x10xf32>
    %cst_4 = arith.constant dense<0.000000e+00> : vector<64xf32>
    %19 = vector.multi_reduction <add>, %18, %cst_4 [1] : vector<64x10xf32> to vector<64xf32>
    %20 = vector.shape_cast %19 : vector<64xf32> to vector<64x1xf32>
    %21 = math.log %20 : vector<64x1xf32>
    %22 = arith.addf %21, %7 : vector<64x1xf32>
    %23 = arith.subf %22, %15 : vector<64x1xf32>
    %24 = math.exp %23 : vector<64x1xf32>
    %cst_5 = arith.constant 1.000000e+00 : f32
    %25 = vector.broadcast %cst_5 : f32 to vector<64x1xf32>
    %26 = arith.subf %25, %24 : vector<64x1xf32>
    %27 = arith.mulf %26, %26 : vector<64x1xf32>
    %28 = arith.mulf %27, %23 : vector<64x1xf32>
    %29 = vector.shape_cast %28 : vector<64x1xf32> to vector<1x64x1xf32>
    %cst_6 = arith.constant dense<0.000000e+00> : vector<1xf32>
    %30 = vector.multi_reduction <add>, %29, %cst_6 [1, 2] : vector<1x64x1xf32> to vector<1xf32>
    %31 = vector.shape_cast %30 : vector<1xf32> to vector<1x1x1xf32>
    %32 = vector.extract %31[0, 0, 0] : f32 from vector<1x1x1xf32>
    %33 = arith.addf %cst, %32 : f32
    %c1_i32 = arith.constant 1 : i32
    %34 = vector.broadcast %33 : f32 to vector<8x128xf32>
    %c0_7 = arith.constant 0 : index
    %c0_8 = arith.constant 0 : index
    %35 = vector.load %arg3[%c0_7, %c0_8] : memref<8x128xf32, #tpu.memory_space<vmem>>, vector<8x128xf32>
    tpu.vector_store %arg3[%c0_7, %c0_8], %34 {strides = array<i32>} : memref<8x128xf32, #tpu.memory_space<vmem>>, vector<8x128xf32>,
    return
  }
  func.func @transform_0(%arg0: i32) -> (i32, i32) {
    %c0_i32 = arith.constant 0 : i32
    %c0_i32_0 = arith.constant 0 : i32
    return %arg0, %c0_i32 : i32, i32
  }
  func.func @transform_1(%arg0: i32) -> (i32, i32) {
    %c0_i32 = arith.constant 0 : i32
    %c0_i32_0 = arith.constant 0 : i32
    return %arg0, %c0_i32 : i32, i32
  }
  func.func @transform_2(%arg0: i32) -> (i32, i32) {
    %c0_i32 = arith.constant 0 : i32
    %c0_i32_0 = arith.constant 0 : i32
    return %arg0, %c0_i32 : i32, i32
  }
}

</mosaic_0001>

<llo_original>
// kernel: tpu_custom_call.1
$region0: #{tpu_custom_call.1}
  #allocation0 [shape = 'u32[]', space=smem, size = 0x4, offset = 0x4, fixed_abs, tag = 'smem constant byte address 0x4 - core index']
  #allocation1 [shape = 'u32[144,128]{1,0:T(1,128)}', space=vmem, size = 0x12000, scoped, tag = 'internal scratch']
  %s0 = inlined_call_operand.vmem [shape: f32[64,10], index: 0, kind: input, shape index: {}]
  %s1 = inlined_call_operand.vmem [shape: s32[64,1], index: 1, kind: input, shape index: {}]
  %s2 = inlined_call_operand.hbm [shape: f32[8,128], index: 2, kind: output, shape index: {}]
  %s3 = sld [smem:[#allocation0]]
  $region18: #{tpu_custom_call.1} parent=0
    _
  %s5 = ssub.s32 1, %s3
  %s6 = scalar_select 0, %s5, %s3
  $region1: #{tpu_custom_call.1} parent=0
    #allocation2 [shape = 'u8[4096]{0}', space=vmem, size = 0x1000, scoped, tag = 'output window, operand 0, single buffered']
    #allocation3 [shape = 's32[1]{0}', space=sflag, size = 0x4, scoped, tag = 'scoped memory for tpu_custom_call.1']
    %7 = vsyncpa [#allocation3], 0
    // Predicated region
    $region2: #{tpu_custom_call.1} parent=1 // pred_check
      _
    $region3: #{tpu_custom_call.1} parent=1 // pred_check_branch
      %9 = sbr.rel (0) target = $region5
    $region4: #{tpu_custom_call.1} parent=1 // pred_region
      _
    $region5: #{tpu_custom_call.1} parent=1 // pred_fallthru
      _
    // Predicated region
    $region6: #{tpu_custom_call.1} parent=1 // pred_check
      _
    $region7: #{tpu_custom_call.1} parent=1 // pred_check_branch
      %11 = sbr.rel (0) target = $region9
    $region8: #{tpu_custom_call.1} parent=1 // pred_region
      _
    $region9: #{tpu_custom_call.1} parent=1 // pred_fallthru
      _
    %v12 = vld [vmem:[%s0] sm:$0xff]
    %v13 = vld [vmem:[%s0 + $0x8] sm:$0xff]
    %v14 = vld [vmem:[%s0 + $0x10] sm:$0xff]
    %v15 = vld [vmem:[%s0 + $0x18] sm:$0xff]
    %v16 = vld [vmem:[%s0 + $0x20] sm:$0xff]
    %v17 = vld [vmem:[%s0 + $0x28] sm:$0xff]
    %v18 = vld [vmem:[%s0 + $0x30] sm:$0xff]
    %v19 = vld [vmem:[%s0 + $0x38] sm:$0xff]
    %v20 = vld [vmem:[%s1] sm:$0xff]
    %v21 = vld [vmem:[%s1 + $0x8] sm:$0xff]
    %v22 = vld [vmem:[%s1 + $0x10] sm:$0xff]
    %v23 = vld [vmem:[%s1 + $0x18] sm:$0xff]
    %v24 = vld [vmem:[%s1 + $0x20] sm:$0xff]
    %v25 = vld [vmem:[%s1 + $0x28] sm:$0xff]
    %v26 = vld [vmem:[%s1 + $0x30] sm:$0xff]
    %v27 = vld [vmem:[%s1 + $0x38] sm:$0xff]
    %vm28 = vcmask 80896
    %v29 = vsel %vm28, %v12, -inf
    %30 = vmax.xlane.f32.xlu0 %v29
    %v31 = vpop.xlane.xlu0 %30
    %v32 = vsel %vm28, %v13, -inf
    %33 = vmax.xlane.f32.xlu0 %v32
    %v34 = vpop.xlane.xlu0 %33
    %v35 = vsel %vm28, %v14, -inf
    %36 = vmax.xlane.f32.xlu0 %v35
    %v37 = vpop.xlane.xlu0 %36
    %v38 = vsel %vm28, %v15, -inf
    %39 = vmax.xlane.f32.xlu0 %v38
    %v40 = vpop.xlane.xlu0 %39
    %v41 = vsel %vm28, %v16, -inf
    %42 = vmax.xlane.f32.xlu0 %v41
    %v43 = vpop.xlane.xlu0 %42
    %v44 = vsel %vm28, %v17, -inf
    %45 = vmax.xlane.f32.xlu0 %v44
    %v46 = vpop.xlane.xlu0 %45
    %v47 = vsel %vm28, %v18, -inf
    %48 = vmax.xlane.f32.xlu0 %v47
    %v49 = vpop.xlane.xlu0 %48
    %v50 = vsel %vm28, %v19, -inf
    %51 = vmax.xlane.f32.xlu0 %v50
    %v52 = vpop.xlane.xlu0 %51
    %v53 = vlaneseq
    %v54 = vand.u32 %v53, 127
    %55 = vset.pattern.permute.xlu0 0
    %56 = vperm.xlu0 %55, %v20
    %v57 = vpop.permute.xlu0 %56
    %58 = vset.pattern.permute.xlu0 0
    %59 = vperm.xlu0 %58, %v21
    %v60 = vpop.permute.xlu0 %59
    %61 = vset.pattern.permute.xlu0 0
    %62 = vperm.xlu0 %61, %v22
    %v63 = vpop.permute.xlu0 %62
    %64 = vset.pattern.permute.xlu0 0
    %65 = vperm.xlu0 %64, %v23
    %v66 = vpop.permute.xlu0 %65
    %67 = vset.pattern.permute.xlu0 0
    %68 = vperm.xlu0 %67, %v24
    %v69 = vpop.permute.xlu0 %68
    %70 = vset.pattern.permute.xlu0 0
    %71 = vperm.xlu0 %70, %v25
    %v72 = vpop.permute.xlu0 %71
    %73 = vset.pattern.permute.xlu0 0
    %74 = vperm.xlu0 %73, %v26
    %v75 = vpop.permute.xlu0 %74
    %76 = vset.pattern.permute.xlu0 0
    %77 = vperm.xlu0 %76, %v27
    %v78 = vpop.permute.xlu0 %77
    %vm79 = vcmp.eq.s32.totalorder %v54, %v57
    %vm80 = vcmp.eq.s32.totalorder %v54, %v60
    %vm81 = vcmp.eq.s32.totalorder %v54, %v63
    %vm82 = vcmp.eq.s32.totalorder %v54, %v66
    %vm83 = vcmp.eq.s32.totalorder %v54, %v69
    %vm84 = vcmp.eq.s32.totalorder %v54, %v72
    %vm85 = vcmp.eq.s32.totalorder %v54, %v75
    %vm86 = vcmp.eq.s32.totalorder %v54, %v78
    %v87 = vsel %vm79, %v12, 0.0
    %v88 = vsel %vm80, %v13, 0.0
    %v89 = vsel %vm81, %v14, 0.0
    %v90 = vsel %vm82, %v15, 0.0
    %v91 = vsel %vm83, %v16, 0.0
    %v92 = vsel %vm84, %v17, 0.0
    %v93 = vsel %vm85, %v18, 0.0
    %v94 = vsel %vm86, %v19, 0.0
    %v95 = vsel %vm28, %v87, 0.0
    %96 = vadd.xlane.f32.xlu0 %v95
    %v97 = vpop.xlane.xlu0 %96
    %v98 = vsel %vm28, %v88, 0.0
    %99 = vadd.xlane.f32.xlu0 %v98
    %v100 = vpop.xlane.xlu0 %99
    %v101 = vsel %vm28, %v89, 0.0
    %102 = vadd.xlane.f32.xlu0 %v101
    %v103 = vpop.xlane.xlu0 %102
    %v104 = vsel %vm28, %v90, 0.0
    %105 = vadd.xlane.f32.xlu0 %v104
    %v106 = vpop.xlane.xlu0 %105
    %v107 = vsel %vm28, %v91, 0.0
    %108 = vadd.xlane.f32.xlu0 %v107
    %v109 = vpop.xlane.xlu0 %108
    %v110 = vsel %vm28, %v92, 0.0
    %111 = vadd.xlane.f32.xlu0 %v110
    %v112 = vpop.xlane.xlu0 %111
    %v113 = vsel %vm28, %v93, 0.0
    %114 = vadd.xlane.f32.xlu0 %v113
    %v115 = vpop.xlane.xlu0 %114
    %v116 = vsel %vm28, %v94, 0.0
    %117 = vadd.xlane.f32.xlu0 %v116
    %v118 = vpop.xlane.xlu0 %117
    %v119 = vsub.f32 %v12, %v31
    %v120 = vsub.f32 %v13, %v34
    %v121 = vsub.f32 %v14, %v37
    %v122 = vsub.f32 %v15, %v40
    %v123 = vsub.f32 %v16, %v43
    %v124 = vsub.f32 %v17, %v46
    %v125 = vsub.f32 %v18, %v49
    %v126 = vsub.f32 %v19, %v52
    %v127 = vmul.f32 %v119, 1.442695
    %v128 = vpow.pop %v127
    %v129 = vmul.f32 %v120, 1.442695
    %v130 = vpow.pop %v129
    %v131 = vmul.f32 %v121, 1.442695
    %v132 = vpow.pop %v131
    %v133 = vmul.f32 %v122, 1.442695
    %v134 = vpow.pop %v133
    %v135 = vmul.f32 %v123, 1.442695
    %v136 = vpow.pop %v135
    %v137 = vmul.f32 %v124, 1.442695
    %v138 = vpow.pop %v137
    %v139 = vmul.f32 %v125, 1.442695
    %v140 = vpow.pop %v139
    %v141 = vmul.f32 %v126, 1.442695
    %v142 = vpow.pop %v141
    %v143 = vsel %vm28, %v128, 0.0
    %144 = vadd.xlane.f32.xlu0 %v143
    %v145 = vpop.xlane.xlu0 %144
    %v146 = vsel %vm28, %v130, 0.0
    %147 = vadd.xlane.f32.xlu0 %v146
    %v148 = vpop.xlane.xlu0 %147
    %v149 = vsel %vm28, %v132, 0.0
    %150 = vadd.xlane.f32.xlu0 %v149
    %v151 = vpop.xlane.xlu0 %150
    %v152 = vsel %vm28, %v134, 0.0
    %153 = vadd.xlane.f32.xlu0 %v152
    %v154 = vpop.xlane.xlu0 %153
    %v155 = vsel %vm28, %v136, 0.0
    %156 = vadd.xlane.f32.xlu0 %v155
    %v157 = vpop.xlane.xlu0 %156
    %v158 = vsel %vm28, %v138, 0.0
    %159 = vadd.xlane.f32.xlu0 %v158
    %v160 = vpop.xlane.xlu0 %159
    %v161 = vsel %vm28, %v140, 0.0
    %162 = vadd.xlane.f32.xlu0 %v161
    %v163 = vpop.xlane.xlu0 %162
    %v164 = vsel %vm28, %v142, 0.0
    %165 = vadd.xlane.f32.xlu0 %v164
    %v166 = vpop.xlane.xlu0 %165
    %v167 = vlog2.pop %v145
    %v168 = vmul.f32 %v167, 0.6931472
    %v169 = vlog2.pop %v148
    %v170 = vmul.f32 %v169, 0.6931472
    %v171 = vlog2.pop %v151
    %v172 = vmul.f32 %v171, 0.6931472
    %v173 = vlog2.pop %v154
    %v174 = vmul.f32 %v173, 0.6931472
    %v175 = vlog2.pop %v157
    %v176 = vmul.f32 %v175, 0.6931472
    %v177 = vlog2.pop %v160
    %v178 = vmul.f32 %v177, 0.6931472
    %v179 = vlog2.pop %v163
    %v180 = vmul.f32 %v179, 0.6931472
    %v181 = vlog2.pop %v166
    %v182 = vmul.f32 %v181, 0.6931472
    %v183 = vadd.f32 %v168, %v31
    %v184 = vadd.f32 %v170, %v34
    %v185 = vadd.f32 %v172, %v37
    %v186 = vadd.f32 %v174, %v40
    %v187 = vadd.f32 %v176, %v43
    %v188 = vadd.f32 %v178, %v46
    %v189 = vadd.f32 %v180, %v49
    %v190 = vadd.f32 %v182, %v52
    %v191 = vsub.f32 %v183, %v97
    %v192 = vsub.f32 %v184, %v100
    %v193 = vsub.f32 %v185, %v103
    %v194 = vsub.f32 %v186, %v106
    %v195 = vsub.f32 %v187, %v109
    %v196 = vsub.f32 %v188, %v112
    %v197 = vsub.f32 %v189, %v115
    %v198 = vsub.f32 %v190, %v118
    %v199 = vmul.f32 %v191, 1.442695
    %v200 = vpow.pop %v199
    %v201 = vmul.f32 %v192, 1.442695
    %v202 = vpow.pop %v201
    %v203 = vmul.f32 %v193, 1.442695
    %v204 = vpow.pop %v203
    %v205 = vmul.f32 %v194, 1.442695
    %v206 = vpow.pop %v205
    %v207 = vmul.f32 %v195, 1.442695
    %v208 = vpow.pop %v207
    %v209 = vmul.f32 %v196, 1.442695
    %v210 = vpow.pop %v209
    %v211 = vmul.f32 %v197, 1.442695
    %v212 = vpow.pop %v211
    %v213 = vmul.f32 %v198, 1.442695
    %v214 = vpow.pop %v213
    %v215 = vsub.f32 1.0, %v200
    %v216 = vsub.f32 1.0, %v202
    %v217 = vsub.f32 1.0, %v204
    %v218 = vsub.f32 1.0, %v206
    %v219 = vsub.f32 1.0, %v208
    %v220 = vsub.f32 1.0, %v210
    %v221 = vsub.f32 1.0, %v212
    %v222 = vsub.f32 1.0, %v214
    %v223 = vmul.f32 %v215, %v215
    %v224 = vmul.f32 %v216, %v216
    %v225 = vmul.f32 %v217, %v217
    %v226 = vmul.f32 %v218, %v218
    %v227 = vmul.f32 %v219, %v219
    %v228 = vmul.f32 %v220, %v220
    %v229 = vmul.f32 %v221, %v221
    %v230 = vmul.f32 %v222, %v222
    %v231 = vmul.f32 %v223, %v191
    %v232 = vmul.f32 %v224, %v192
    %v233 = vmul.f32 %v225, %v193
    %v234 = vmul.f32 %v226, %v194
    %v235 = vmul.f32 %v227, %v195
    %v236 = vmul.f32 %v228, %v196
    %v237 = vmul.f32 %v229, %v197
    %v238 = vmul.f32 %v230, %v198
    %vm239 = vcmask 7168
    %v240 = vsel %vm239, %v231, 0.0
    %v241 = vsel %vm239, %v232, 0.0
    %v242 = vadd.f32 %v240, %v241
    %v243 = vsel %vm239, %v233, 0.0
    %v244 = vadd.f32 %v242, %v243
    %v245 = vsel %vm239, %v234, 0.0
    %v246 = vadd.f32 %v244, %v245
    %v247 = vsel %vm239, %v235, 0.0
    %v248 = vadd.f32 %v246, %v247
    %v249 = vsel %vm239, %v236, 0.0
    %v250 = vadd.f32 %v248, %v249
    %v251 = vsel %vm239, %v237, 0.0
    %v252 = vadd.f32 %v250, %v251
    %v253 = vsel %vm239, %v238, 0.0
    %v254 = vadd.f32 %v252, %v253
    %255 = vadd.xlane.f32.xlu0 %v254
    %v256 = vpop.xlane.xlu0 %255
    %v257 = vrot.slane %v256, 4
    %v258 = vadd.f32 %v256, %v257
    %v259 = vrot.slane %v258, 2
    %v260 = vadd.f32 %v258, %v259
    %v261 = vrot.slane %v260, 1
    %v262 = vadd.f32 %v260, %v261
    %s263 = vtos %v262
    %s264 = sadd.f32 %s263, 0.0
    %v265 = vstv %s264
    %266 = vst [vmem:[#allocation2] sm:$0xff] %v265
    // Predicated region
    $region10: #{tpu_custom_call.1} parent=1 // pred_check
      _
    $region11: #{tpu_custom_call.1} parent=1 // pred_check_branch
      %268 = sbr.rel (0) target = $region13
    $region12: #{tpu_custom_call.1} parent=1 // pred_region
      %s270 = ssub.s32 128, 128
      %271 = vsyncadd [#allocation3], %s270
      %s273 = sshll.u32 [#allocation2], 4
      %s274 = int_to_ptr.vmem [resolvable:$true] %s273
      %276 = dma.vmem_to_hbm [thread:$0]  %s274, 128, %s2, [#allocation3]
    $region13: #{tpu_custom_call.1} parent=1 // pred_fallthru
      _
    // Predicated region
    $region14: #{tpu_custom_call.1} parent=1 // pred_check
      _
    $region15: #{tpu_custom_call.1} parent=1 // pred_check_branch
      %278 = sbr.rel (0) target = $region17
    $region16: #{tpu_custom_call.1} parent=1 // pred_region
      %279 = dma.done [#allocation3], 128
    $region17: #{tpu_custom_call.1} parent=1 // pred_fallthru
      _
    %280 = vsyncpa [#allocation3], 1

</llo_original>
